<compile_context>
chip_gen: v5e
topology: v5e:2x2
jax: 0.10.0
libtpu: 0.0.40
codegen_flags: <defaults>
</compile_context>

<pallas_src>
import jax
import jax.numpy as jnp
from jax import lax
from jax.experimental import pallas as pl
from jax.experimental.pallas import tpu as pltpu

LANES = 128
SUBLANES = 8
TARGET_TILE_ROWS = 4096      # 4096 x 128 f32 = 2 MiB per input block


def _num_core_split():
    """2 on chips whose TensorCores share HBM (v7x, v4/v5p megacore), else 1."""
    try:
        kind = jax.devices()[0].device_kind.lower()
    except Exception:
        return 1
    if ("v7" in kind) or ("tpu7" in kind) or ("v4" in kind) or ("v5p" in kind):
        return 2
    return 1


def silog_loss(depth_est, depth_gt, variance_focus):
    """Matches:
        mask = depth_gt > 1.0
        d = log(depth_est[mask]) - log(depth_gt[mask])
        sqrt((d**2).mean() - variance_focus * d.mean()**2) * 10.0
    (If no element has gt > 1, the result is NaN, same as the PyTorch module.)
    """
    assert depth_est.shape == depth_gt.shape
    n = depth_est.size
    assert n > 0

    est = depth_est.reshape(-1)
    gt = depth_gt.reshape(-1)

    # Dtype-aware padding: pad rows to the packed native sublane multiple
    # (8 for 32-bit, 16 for 16-bit, 32 for 8-bit) so blocks match Mosaic's
    # packed tile and bf16 inputs DMA at half the bytes without relayout.
    itemsize = min(jnp.dtype(est.dtype).itemsize, jnp.dtype(gt.dtype).itemsize)
    sub_mult = max(SUBLANES, (SUBLANES * 4) // max(int(itemsize), 1))
    chunk_elems = sub_mult * LANES

    padded = pl.cdiv(n, chunk_elems) * chunk_elems
    if padded != n:
        est = jnp.pad(est, (0, padded - n))
        gt = jnp.pad(gt, (0, padded - n))

    rows = padded // LANES                         # multiple of sub_mult
    est2d = est.reshape(rows, LANES)
    gt2d = gt.reshape(rows, LANES)

    tile = min(TARGET_TILE_ROWS, rows)             # multiple of sub_mult
    total_blocks = pl.cdiv(rows, tile)

    ncores = max(1, min(_num_core_split(), total_blocks))
    steps = pl.cdiv(total_blocks, ncores)

    # Inner-loop chunk = one packed native tile of the input dtype.
    crow = sub_mult                                # rows per inner iteration
    groups = tile // crow                          # chunks per (full) block

    # Static tail info: only the last logical block can contain pad bytes or
    # Pallas block-boundary garbage. All quantities are Python ints.
    has_tail = (total_blocks * tile * LANES) != n
    tail_valid = n - (total_blocks - 1) * tile * LANES   # valid elems, >= 1
    tail_groups = max(1, pl.cdiv(tail_valid, crow * LANES))

    def kernel(est_ref, gt_ref, acc_ref):
        core = pl.program_id(0)
        step = pl.program_id(1)

        @pl.when(step == 0)
        def _init():
            acc_ref[...] = jnp.zeros_like(acc_ref)

        block = core * steps + step

        def fold(num_chunks, valid):
            # Fold `num_chunks` (crow, LANES) chunks of this block into three
            # register-resident f32 partials. `valid` is None for fully-valid
            # interior blocks, else the static count of real elements in this
            # block (pad / ragged tail masked via a local index compare).
            if valid is not None:
                ridx = lax.broadcasted_iota(jnp.int32, (crow, LANES), 0)
                lidx = lax.broadcasted_iota(jnp.int32, (crow, LANES), 1)
                local = ridx * LANES + lidx        # constant, loop-invariant

            def body(c, carry):
                sd, sd2, sm = carry
                r0 = pl.multiple_of(c * crow, crow)
                e = est_ref[pl.ds(r0, crow), :].astype(jnp.float32)
                g = gt_ref[pl.ds(r0, crow), :].astype(jnp.float32)
                mask = g > 1.0
                if valid is not None:
                    mask = mask & (local < (valid - c * (crow * LANES)))
                # Single log per element; masked lanes get ratio=1 -> d=0.
                # Approx reciprocal (EUP) instead of exact divide; ~2^-12
                # relative error inside a log is negligible for a loss.
                ratio = jnp.where(mask, e * pl.reciprocal(g, approx=True), 1.0)
                d = jnp.log(ratio)
                return (sd + d, sd2 + d * d, sm + mask.astype(jnp.float32))

            zero = jnp.zeros((crow, LANES), jnp.float32)
            unroll = min(8, num_chunks)
            sd, sd2, sm = lax.fori_loop(0, num_chunks, body,
                                        (zero, zero, zero), unroll=unroll)

            def to_vreg(x):
                if crow == SUBLANES:
                    return x
                return jnp.sum(x.reshape(crow // SUBLANES, SUBLANES, LANES),
                               axis=0)

            # Three full-vreg (8,128) read-modify-writes per grid step.
            acc_ref[0 * SUBLANES:1 * SUBLANES, :] += to_vreg(sd)
            acc_ref[1 * SUBLANES:2 * SUBLANES, :] += to_vreg(sd2)
            acc_ref[2 * SUBLANES:3 * SUBLANES, :] += to_vreg(sm)

        if has_tail:
            last = total_blocks - 1

            @pl.when(block == last)
            def _ragged():
                fold(tail_groups, tail_valid)

            @pl.when(block < last)
            def _dense():
                fold(groups, None)
        else:
            @pl.when(block < total_blocks)
            def _dense():
                fold(groups, None)

    def in_map(c, i):
        # Clamp so a trailing duplicate on the multi-core path never issues an
        # out-of-bounds DMA; its compute is skipped by the in-kernel guards.
        return (jnp.minimum(c * steps + i, total_blocks - 1), 0)

    acc = pl.pallas_call(
        kernel,
        out_shape=jax.ShapeDtypeStruct((ncores, 3 * SUBLANES, LANES),
                                       jnp.float32),
        grid_spec=pltpu.PrefetchScalarGridSpec(
            num_scalar_prefetch=0,
            grid=(ncores, steps),
            in_specs=[
                pl.BlockSpec((tile, LANES), in_map),
                pl.BlockSpec((tile, LANES), in_map),
            ],
            out_specs=pl.BlockSpec((None, 3 * SUBLANES, LANES),
                                   lambda c, i: (c, 0, 0)),
        ),
        compiler_params=pltpu.CompilerParams(
            dimension_semantics=("parallel", "arbitrary"),
        ),
    )(est2d, gt2d)

    sum_d = jnp.sum(acc[:, 0:SUBLANES, :])
    sum_d2 = jnp.sum(acc[:, SUBLANES:2 * SUBLANES, :])
    count = jnp.sum(acc[:, 2 * SUBLANES:3 * SUBLANES, :])

    d_mean = sum_d / count
    d2_mean = sum_d2 / count
    var = d2_mean - variance_focus * d_mean * d_mean
    # Clamp tiny negative fp rounding when the true variance is ~0
    # (PyTorch would produce NaN there); count==0 still yields NaN.
    return jnp.sqrt(jnp.maximum(var, 0.0)) * 10.0


if __name__ == "__main__":
    variance_focus = 0.85  # typical value used with silog_loss

    key = jax.random.PRNGKey(0)
    k1, k2 = jax.random.split(key)
    shape = (2, 4, 16, 16)  # NCHW
    # Depths in a realistic positive range; some gt values <= 1 so the mask matters.
    depth_est = jax.random.uniform(k1, shape, jnp.float32, minval=0.5, maxval=10.0)
    depth_gt = jax.random.uniform(k2, shape, jnp.float32, minval=0.5, maxval=10.0)

    loss = silog_loss(depth_est, depth_gt, variance_focus)
    loss = jax.block_until_ready(loss)

    # Reference check in plain JAX (boolean-mask semantics).
    mask = depth_gt > 1.0
    d = jnp.where(mask, jnp.log(jnp.where(mask, depth_est, 1.0))
                  - jnp.log(jnp.where(mask, depth_gt, 1.0)), 0.0)
    cnt = jnp.sum(mask)
    ref = jnp.sqrt(jnp.sum(d * d) / cnt
                   - variance_focus * (jnp.sum(d) / cnt) ** 2) * 10.0
    # Tolerance accounts for the approximate (EUP) reciprocal used in-kernel
    # (~2^-12 relative error on est/gt -> ~1e-3 on the final loss).
    assert jnp.allclose(loss, ref, rtol=1e-2, atol=1e-2), (loss, ref)

    print("KERNEL_OK")
</pallas_src>

<mosaic_0001>
module attributes {stable_mosaic.version = 11 : i64} {
  func.func @kernel(%arg0: i32, %arg1: i32, %arg2: memref<16x128xf32, #tpu.memory_space<vmem>>, %arg3: memref<16x128xf32, #tpu.memory_space<vmem>>, %arg4: memref<1x24x128xf32, #tpu.memory_space<vmem>>) attributes {dimension_semantics = [#tpu.dimension_semantics<parallel>, #tpu.dimension_semantics<arbitrary>], iteration_bounds = array<i64: 1, 1>, scalar_prefetch = 0 : i64, scratch_operands = 0 : i64, tpu.core_type = #tpu.core_type<tc>, window_params = [{transform_indices = @transform_0, window_bounds = array<i64: 16, 128>}, {transform_indices = @transform_1, window_bounds = array<i64: 16, 128>}, {transform_indices = @transform_2, window_bounds = array<i64: 1, 24, 128>}]} {
    %c0_i32 = arith.constant 0 : i32
    %0 = arith.cmpi eq, %arg1, %c0_i32 : i32
    %1 = arith.extui %0 : i1 to i32
    %c0_i32_0 = arith.constant 0 : i32
    %2 = arith.cmpi ne, %1, %c0_i32_0 : i32
    scf.if %2 {
      %cst = arith.constant 0.000000e+00 : f32
      %8 = vector.broadcast %cst : f32 to vector<24x128xf32>
      %c0 = arith.constant 0 : index
      %c0_3 = arith.constant 0 : index
      %c0_4 = arith.constant 0 : index
      %9 = vector.load %arg4[%c0, %c0_3, %c0_4] : memref<1x24x128xf32, #tpu.memory_space<vmem>>, vector<1x24x128xf32>
      %10 = vector.shape_cast %9 : vector<1x24x128xf32> to vector<24x128xf32>
      %11 = vector.shape_cast %8 : vector<24x128xf32> to vector<1x24x128xf32>
      tpu.vector_store %arg4[%c0, %c0_3, %c0_4], %11 {strides = array<i32>} : memref<1x24x128xf32, #tpu.memory_space<vmem>>, vector<1x24x128xf32>,
    } else {
    }
    %c1_i32 = arith.constant 1 : i32
    %3 = arith.muli %arg0, %c1_i32 : i32
    %4 = arith.addi %3, %arg1 : i32
    %c1_i32_1 = arith.constant 1 : i32
    %5 = arith.cmpi slt, %4, %c1_i32_1 : i32
    %6 = arith.extui %5 : i1 to i32
    %c0_i32_2 = arith.constant 0 : i32
    %7 = arith.cmpi ne, %6, %c0_i32_2 : i32
    scf.if %7 {
      %cst = arith.constant 0.000000e+00 : f32
      %8 = vector.broadcast %cst : f32 to vector<8x128xf32>
      %c0_i32_3 = arith.constant 0 : i32
      %c8_i32 = arith.constant 8 : i32
      %9 = arith.muli %c0_i32_3, %c8_i32 : i32
      %10 = tpu.assume_multiple %9, 8 : i32
      %11 = arith.index_cast %10 : i32 to index
      %c0 = arith.constant 0 : index
      %12 = vector.load %arg2[%11, %c0] : memref<16x128xf32, #tpu.memory_space<vmem>>, vector<8x128xf32>
      %13 = arith.index_cast %10 : i32 to index
      %c0_4 = arith.constant 0 : index
      %14 = vector.load %arg3[%13, %c0_4] : memref<16x128xf32, #tpu.memory_space<vmem>>, vector<8x128xf32>
      %cst_5 = arith.constant 1.000000e+00 : f32
      %15 = vector.broadcast %cst_5 : f32 to vector<8x128xf32>
      %16 = arith.cmpf ogt, %14, %15 : vector<8x128xf32>
      %17 = tpu.reciprocal %14 {approx = true} : vector<8x128xf32> -> vector<8x128xf32>
      %18 = arith.mulf %12, %17 : vector<8x128xf32>
      %cst_6 = arith.constant 1.000000e+00 : f32
      %19 = vector.broadcast %cst_6 : f32 to vector<8x128xf32>
      %20 = arith.select %16, %18, %19 : vector<8x128xi1>, vector<8x128xf32>
      %21 = math.log %20 : vector<8x128xf32>
      %22 = arith.addf %8, %21 : vector<8x128xf32>
      %23 = arith.mulf %21, %21 : vector<8x128xf32>
      %24 = arith.addf %8, %23 : vector<8x128xf32>
      %25 = arith.extui %16 : vector<8x128xi1> to vector<8x128xi32>
      %26 = arith.sitofp %25 : vector<8x128xi32> to vector<8x128xf32>
      %27 = arith.addf %8, %26 : vector<8x128xf32>
      %c1_i32_7 = arith.constant 1 : i32
      %c8_i32_8 = arith.constant 8 : i32
      %28 = arith.muli %c1_i32_7, %c8_i32_8 : i32
      %29 = tpu.assume_multiple %28, 8 : i32
      %30 = arith.index_cast %29 : i32 to index
      %c0_9 = arith.constant 0 : index
      %31 = vector.load %arg2[%30, %c0_9] : memref<16x128xf32, #tpu.memory_space<vmem>>, vector<8x128xf32>
      %32 = arith.index_cast %29 : i32 to index
      %c0_10 = arith.constant 0 : index
      %33 = vector.load %arg3[%32, %c0_10] : memref<16x128xf32, #tpu.memory_space<vmem>>, vector<8x128xf32>
      %cst_11 = arith.constant 1.000000e+00 : f32
      %34 = vector.broadcast %cst_11 : f32 to vector<8x128xf32>
      %35 = arith.cmpf ogt, %33, %34 : vector<8x128xf32>
      %36 = tpu.reciprocal %33 {approx = true} : vector<8x128xf32> -> vector<8x128xf32>
      %37 = arith.mulf %31, %36 : vector<8x128xf32>
      %cst_12 = arith.constant 1.000000e+00 : f32
      %38 = vector.broadcast %cst_12 : f32 to vector<8x128xf32>
      %39 = arith.select %35, %37, %38 : vector<8x128xi1>, vector<8x128xf32>
      %40 = math.log %39 : vector<8x128xf32>
      %41 = arith.addf %22, %40 : vector<8x128xf32>
      %42 = arith.mulf %40, %40 : vector<8x128xf32>
      %43 = arith.addf %24, %42 : vector<8x128xf32>
      %44 = arith.extui %35 : vector<8x128xi1> to vector<8x128xi32>
      %45 = arith.sitofp %44 : vector<8x128xi32> to vector<8x128xf32>
      %46 = arith.addf %27, %45 : vector<8x128xf32>
      %c2_i32 = arith.constant 2 : i32
      %c0_13 = arith.constant 0 : index
      %c0_14 = arith.constant 0 : index
      %c0_15 = arith.constant 0 : index
      %47 = vector.load %arg4[%c0_13, %c0_14, %c0_15] : memref<1x24x128xf32, #tpu.memory_space<vmem>>, vector<1x8x128xf32>
      %48 = vector.shape_cast %47 : vector<1x8x128xf32> to vector<8x128xf32>
      %49 = arith.addf %48, %41 : vector<8x128xf32>
      %c0_16 = arith.constant 0 : index
      %c0_17 = arith.constant 0 : index
      %c0_18 = arith.constant 0 : index
      %50 = vector.load %arg4[%c0_16, %c0_17, %c0_18] : memref<1x24x128xf32, #tpu.memory_space<vmem>>, vector<1x8x128xf32>
      %51 = vector.shape_cast %50 : vector<1x8x128xf32> to vector<8x128xf32>
      %52 = vector.shape_cast %49 : vector<8x128xf32> to vector<1x8x128xf32>
      tpu.vector_store %arg4[%c0_16, %c0_17, %c0_18], %52 {strides = array<i32>} : memref<1x24x128xf32, #tpu.memory_space<vmem>>, vector<1x8x128xf32>,
      %c0_19 = arith.constant 0 : index
      %c8 = arith.constant 8 : index
      %c0_20 = arith.constant 0 : index
      %53 = vector.load %arg4[%c0_19, %c8, %c0_20] : memref<1x24x128xf32, #tpu.memory_space<vmem>>, vector<1x8x128xf32>
      %54 = vector.shape_cast %53 : vector<1x8x128xf32> to vector<8x128xf32>
      %55 = arith.addf %54, %43 : vector<8x128xf32>
      %c0_21 = arith.constant 0 : index
      %c8_22 = arith.constant 8 : index
      %c0_23 = arith.constant 0 : index
      %56 = vector.load %arg4[%c0_21, %c8_22, %c0_23] : memref<1x24x128xf32, #tpu.memory_space<vmem>>, vector<1x8x128xf32>
      %57 = vector.shape_cast %56 : vector<1x8x128xf32> to vector<8x128xf32>
      %58 = vector.shape_cast %55 : vector<8x128xf32> to vector<1x8x128xf32>
      tpu.vector_store %arg4[%c0_21, %c8_22, %c0_23], %58 {strides = array<i32>} : memref<1x24x128xf32, #tpu.memory_space<vmem>>, vector<1x8x128xf32>,
      %c0_24 = arith.constant 0 : index
      %c16 = arith.constant 16 : index
      %c0_25 = arith.constant 0 : index
      %59 = vector.load %arg4[%c0_24, %c16, %c0_25] : memref<1x24x128xf32, #tpu.memory_space<vmem>>, vector<1x8x128xf32>
      %60 = vector.shape_cast %59 : vector<1x8x128xf32> to vector<8x128xf32>
      %61 = arith.addf %60, %46 : vector<8x128xf32>
      %c0_26 = arith.constant 0 : index
      %c16_27 = arith.constant 16 : index
      %c0_28 = arith.constant 0 : index
      %62 = vector.load %arg4[%c0_26, %c16_27, %c0_28] : memref<1x24x128xf32, #tpu.memory_space<vmem>>, vector<1x8x128xf32>
      %63 = vector.shape_cast %62 : vector<1x8x128xf32> to vector<8x128xf32>
      %64 = vector.shape_cast %61 : vector<8x128xf32> to vector<1x8x128xf32>
      tpu.vector_store %arg4[%c0_26, %c16_27, %c0_28], %64 {strides = array<i32>} : memref<1x24x128xf32, #tpu.memory_space<vmem>>, vector<1x8x128xf32>,
    } else {
    }
    return
  }
  func.func @transform_0(%arg0: i32, %arg1: i32) -> (i32, i32) {
    %c1_i32 = arith.constant 1 : i32
    %0 = arith.muli %arg0, %c1_i32 : i32
    %1 = arith.addi %0, %arg1 : i32
    %c0_i32 = arith.constant 0 : i32
    %2 = arith.minsi %1, %c0_i32 : i32
    %c0_i32_0 = arith.constant 0 : i32
    %c0_i32_1 = arith.constant 0 : i32
    return %2, %c0_i32_0 : i32, i32
  }
  func.func @transform_1(%arg0: i32, %arg1: i32) -> (i32, i32) {
    %c1_i32 = arith.constant 1 : i32
    %0 = arith.muli %arg0, %c1_i32 : i32
    %1 = arith.addi %0, %arg1 : i32
    %c0_i32 = arith.constant 0 : i32
    %2 = arith.minsi %1, %c0_i32 : i32
    %c0_i32_0 = arith.constant 0 : i32
    %c0_i32_1 = arith.constant 0 : i32
    return %2, %c0_i32_0 : i32, i32
  }
  func.func @transform_2(%arg0: i32, %arg1: i32) -> (i32, i32, i32) {
    %c0_i32 = arith.constant 0 : i32
    %c0_i32_0 = arith.constant 0 : i32
    %c0_i32_1 = arith.constant 0 : i32
    return %arg0, %c0_i32, %c0_i32_0 : i32, i32, i32
  }
}

</mosaic_0001>

<llo_original>
// kernel: tpu_custom_call.1
$region0: #{tpu_custom_call.1}
  #allocation0 [shape = 'u32[]', space=smem, size = 0x4, offset = 0x4, fixed_abs, tag = 'smem constant byte address 0x4 - core index']
  #allocation1 [shape = 'u32[72,128]{1,0:T(1,128)}', space=vmem, size = 0x9000, scoped, tag = 'internal scratch']
  %s0 = inlined_call_operand.hbm [shape: f32[16,128], index: 0, kind: input, shape index: {}]
  %s1 = inlined_call_operand.hbm [shape: f32[16,128], index: 1, kind: input, shape index: {}]
  %s2 = inlined_call_operand.hbm [shape: f32[1,24,128], index: 2, kind: output, shape index: {}]
  %s3 = sld [smem:[#allocation0]]
  $region34: #{tpu_custom_call.1} parent=0
    _
  %s5 = ssub.s32 1, %s3
  %s6 = scalar_select 0, %s5, %s3
  $region1: #{tpu_custom_call.1} parent=0
    #allocation2 [shape = 'u8[8192]{0}', space=vmem, size = 0x2000, scoped, tag = 'input window, operand 0, single buffered']
    #allocation3 [shape = 's32[1]{0}', space=sflag, size = 0x4, scoped, tag = 'scoped memory for tpu_custom_call.1']
    #allocation4 [shape = 's32[1]{0}', space=sflag, size = 0x4, scoped, tag = 'scoped memory for tpu_custom_call.1']
    #allocation5 [shape = 'u8[8192]{0}', space=vmem, size = 0x2000, scoped, tag = 'input window, operand 1, single buffered']
    #allocation6 [shape = 's32[1]{0}', space=sflag, size = 0x4, scoped, tag = 'scoped memory for tpu_custom_call.1']
    #allocation7 [shape = 'u8[12288]{0}', space=vmem, size = 0x3000, scoped, tag = 'output window, operand 0, single buffered']
    %7 = vsyncpa [#allocation3], 0
    %8 = vsyncpa [#allocation6], 0
    %9 = vsyncpa [#allocation4], 0
    // Predicated region
    $region2: #{tpu_custom_call.1} parent=1 // pred_check
      _
    $region3: #{tpu_custom_call.1} parent=1 // pred_check_branch
      %11 = sbr.rel (0) target = $region5
    $region4: #{tpu_custom_call.1} parent=1 // pred_region
      %s12 = sadd.s32 0, 0
      %p13 = scmp.lt.s32.totalorder %s12, 0
      %s14 = scalar_select %p13, %s12, 0
      %s15 = smul.u32 2, %s14
      %17 = vsyncadd [#allocation3], 0
      %s18 = smul.addr %s15, 8
      %s19 = scalar_lea.hbm %s0, %s18
      %s20 = sshll.u32 %s19, 4
      %s21 = int_to_ptr.hbm [resolvable:$true] %s20
      %s22 = sshll.u32 [#allocation2], 4
      %s23 = int_to_ptr.vmem [resolvable:$true] %s22
      %28 = dma.hbm_to_vmem [thread:$0]  %s21, 256, %s23, [#allocation3], 128, 128, 8
    $region5: #{tpu_custom_call.1} parent=1 // pred_fallthru
      _
    // Predicated region
    $region6: #{tpu_custom_call.1} parent=1 // pred_check
      _
    $region7: #{tpu_custom_call.1} parent=1 // pred_check_branch
      %30 = sbr.rel (0) target = $region9
    $region8: #{tpu_custom_call.1} parent=1 // pred_region
      %s31 = sadd.s32 0, 0
      %p32 = scmp.lt.s32.totalorder %s31, 0
      %s33 = scalar_select %p32, %s31, 0
      %s34 = smul.u32 2, %s33
      %36 = vsyncadd [#allocation6], 0
      %s37 = smul.addr %s34, 8
      %s38 = scalar_lea.hbm %s1, %s37
      %s39 = sshll.u32 %s38, 4
      %s40 = int_to_ptr.hbm [resolvable:$true] %s39
      %s41 = sshll.u32 [#allocation5], 4
      %s42 = int_to_ptr.vmem [resolvable:$true] %s41
      %47 = dma.hbm_to_vmem [thread:$0]  %s40, 256, %s42, [#allocation6], 128, 128, 8
    $region9: #{tpu_custom_call.1} parent=1 // pred_fallthru
      _
    // Predicated region
    $region10: #{tpu_custom_call.1} parent=1 // pred_check
      _
    $region11: #{tpu_custom_call.1} parent=1 // pred_check_branch
      %49 = sbr.rel (0) target = $region13
    $region12: #{tpu_custom_call.1} parent=1 // pred_region
      %51 = dma.done [#allocation3], 256
    $region13: #{tpu_custom_call.1} parent=1 // pred_fallthru
      _
    // Predicated region
    $region14: #{tpu_custom_call.1} parent=1 // pred_check
      _
    $region15: #{tpu_custom_call.1} parent=1 // pred_check_branch
      %53 = sbr.rel (0) target = $region17
    $region16: #{tpu_custom_call.1} parent=1 // pred_region
      %55 = dma.done [#allocation6], 256
    $region17: #{tpu_custom_call.1} parent=1 // pred_fallthru
      _
    %s56 = sadd.s32 0, 0
    %p57 = scmp.lt.s32.totalorder %s56, 0
    %s58 = scalar_select %p57, %s56, 0
    %s59 = smul.u32 2, %s58
    %s60 = sadd.s32 0, 0
    %p61 = scmp.lt.s32.totalorder %s60, 0
    %s62 = scalar_select %p61, %s60, 0
    %s63 = smul.u32 2, %s62
    %p64 = scmp.eq.s32.totalorder 0, 0
    // Predicated region
    $region18: #{tpu_custom_call.1} parent=1 // pred_check
      %p65 = pneg %p64
    $region19: #{tpu_custom_call.1} parent=1 // pred_check_branch
      %67 = sbr.rel (%p65) target = $region21
    $region20: #{tpu_custom_call.1} parent=1 // pred_region
      %68 = vst [vmem:[#allocation7] sm:$0xff] 0.0
      %69 = vst [vmem:[#allocation7 + $0x8] sm:$0xff] 0.0
      %70 = vst [vmem:[#allocation7 + $0x10] sm:$0xff] 0.0
    $region21: #{tpu_custom_call.1} parent=1 // pred_fallthru
      _
    %s71 = sadd.s32 0, 0
    %p72 = scmp.lt.s32.totalorder %s71, 1
    // Predicated region
    $region22: #{tpu_custom_call.1} parent=1 // pred_check
      %p73 = pneg %p72
    $region23: #{tpu_custom_call.1} parent=1 // pred_check_branch
      %75 = sbr.rel (%p73) target = $region25
    $region24: #{tpu_custom_call.1} parent=1 // pred_region
      %v76 = vld [vmem:[#allocation2] sm:$0xff]
      %v77 = vld [vmem:[#allocation5] sm:$0xff]
      %vm78 = vcmp.gt.f32.partialorder %v77, 1.0
      %v79 = vrcp.pop %v77
      %v80 = vmul.f32 %v76, %v79
      %v81 = vsel %vm78, %v80, 1.0
      %v82 = vlog2.pop %v81
      %v83 = vmul.f32 %v82, 0.6931472
      %v84 = vadd.f32 %v83, 0.0
      %v85 = vmul.f32 %v83, %v83
      %v86 = vadd.f32 %v85, 0.0
      %v87 = vsel %vm78, 1, 0
      %v88 = vcvt.s32.f32 %v87
      %v89 = vadd.f32 %v88, 0.0
      %s90 = scalar_lea.vmem [#allocation2], 8
      %v91 = vld [vmem:[%s90] sm:$0xff]
      %s92 = scalar_lea.vmem [#allocation5], 8
      %v93 = vld [vmem:[%s92] sm:$0xff]
      %vm94 = vcmp.gt.f32.partialorder %v93, 1.0
      %v95 = vrcp.pop %v93
      %v96 = vmul.f32 %v91, %v95
      %v97 = vsel %vm94, %v96, 1.0
      %v98 = vlog2.pop %v97
      %v99 = vmul.f32 %v98, 0.6931472
      %v100 = vadd.f32 %v84, %v99
      %v101 = vmul.f32 %v99, %v99
      %v102 = vadd.f32 %v86, %v101
      %v103 = vsel %vm94, 1, 0
      %v104 = vcvt.s32.f32 %v103
      %v105 = vadd.f32 %v89, %v104
      %v106 = vld [vmem:[#allocation7] sm:$0xff]
      %v107 = vadd.f32 %v106, %v100
      %108 = vst [vmem:[#allocation7] sm:$0xff] %v107
      %v109 = vld [vmem:[#allocation7 + $0x8] sm:$0xff]
      %v110 = vadd.f32 %v109, %v102
      %111 = vst [vmem:[#allocation7 + $0x8] sm:$0xff] %v110
      %v112 = vld [vmem:[#allocation7 + $0x10] sm:$0xff]
      %v113 = vadd.f32 %v112, %v105
      %114 = vst [vmem:[#allocation7 + $0x10] sm:$0xff] %v113
    $region25: #{tpu_custom_call.1} parent=1 // pred_fallthru
      _
    // Predicated region
    $region26: #{tpu_custom_call.1} parent=1 // pred_check
      _
    $region27: #{tpu_custom_call.1} parent=1 // pred_check_branch
      %116 = sbr.rel (0) target = $region29
    $region28: #{tpu_custom_call.1} parent=1 // pred_region
      %118 = vsyncadd [#allocation4], 0
      %s119 = sshll.u32 [#allocation7], 4
      %s120 = int_to_ptr.vmem [resolvable:$true] %s119
      %s121 = sshll.u32 %s2, 4
      %s122 = int_to_ptr.hbm [resolvable:$true] %s121
      %127 = dma.vmem_to_hbm [thread:$0]  %s120, 384, %s122, [#allocation4], 128, 128, 8
    $region29: #{tpu_custom_call.1} parent=1 // pred_fallthru
      _
    // Predicated region
    $region30: #{tpu_custom_call.1} parent=1 // pred_check
      _
    $region31: #{tpu_custom_call.1} parent=1 // pred_check_branch
      %129 = sbr.rel (0) target = $region33
    $region32: #{tpu_custom_call.1} parent=1 // pred_region
      %131 = dma.done [#allocation4], 384
    $region33: #{tpu_custom_call.1} parent=1 // pred_fallthru
      _
    %132 = vsyncpa [#allocation3], 1
    %133 = vsyncpa [#allocation6], 1
    %134 = vsyncpa [#allocation4], 1

</llo_original>
